<compile_context>
chip_gen: v5e
topology: v5e:2x2
jax: 0.10.0
libtpu: 0.0.40
codegen_flags: <defaults>
</compile_context>

<pallas_src>
import functools

import jax
import jax.numpy as jnp
import numpy as np
from jax import lax
from jax.experimental import pallas as pl
from jax.experimental.pallas import tpu as pltpu

BN_EPS = 1e-5
LANES = 128
TM_GRAIN = 128                          # M-tile granularity (MXU / bf16-sublane friendly)
VMEM_LIMIT_BYTES = 48 * 1024 * 1024     # explicit scoped-VMEM cap (fits v7x 64 MiB; v5e/v6e have 128 MiB)
VMEM_TILE_BUDGET = 36 * 1024 * 1024     # per-step working-set budget used to pick TM


def _round_up(x, m):
    return (x + m - 1) // m * m


# ---------------------------------------------------------------------------
# Kernels
# ---------------------------------------------------------------------------
def _stats_kernel(p_ref, w_ref, sum_ref, sq_ref):
    """Recompute path, pass 1: conv matmul for one M-tile; accumulate per-channel moments."""
    @pl.when(pl.program_id(1) == 0)
    def _():
        sum_ref[...] = jnp.zeros_like(sum_ref)
        sq_ref[...] = jnp.zeros_like(sq_ref)

    y = jnp.dot(p_ref[...], w_ref[...], preferred_element_type=jnp.float32)
    sum_ref[...] += jnp.sum(y, axis=0, keepdims=True)[None]
    sq_ref[...] += jnp.sum(y * y, axis=0, keepdims=True)[None]


def _matmul_stats_kernel(p_ref, w_ref, y_ref, sum_ref, sq_ref, *, cout):
    """Materialize path, pass 1: conv matmul, accumulate moments, store y in compute_dtype."""
    @pl.when(pl.program_id(1) == 0)
    def _():
        sum_ref[...] = jnp.zeros_like(sum_ref)
        sq_ref[...] = jnp.zeros_like(sq_ref)

    y = jnp.dot(p_ref[...], w_ref[...], preferred_element_type=jnp.float32)
    sum_ref[...] += jnp.sum(y, axis=0, keepdims=True)[None]
    sq_ref[...] += jnp.sum(y * y, axis=0, keepdims=True)[None]
    y_ref[...] = y[:, :cout].astype(y_ref.dtype)          # narrow (exact-width) store


def _recompute_apply_kernel(p_ref, w_ref, aff_ref, o_ref, *, cout):
    """Recompute path, pass 2: redo the matmul, apply folded BN affine + ReLU."""
    y = jnp.dot(p_ref[...], w_ref[...], preferred_element_type=jnp.float32)
    scale = aff_ref[0:1, :]
    shift = aff_ref[1:2, :]
    o_ref[...] = jnp.maximum(y[:, :cout] * scale + shift, 0.0).astype(o_ref.dtype)


def _affine_relu_kernel(y_ref, aff_ref, o_ref):
    """Materialize path, pass 2: pure VPU affine + ReLU over the stored conv output."""
    y = y_ref[...].astype(jnp.float32)
    scale = aff_ref[0:1, :]
    shift = aff_ref[1:2, :]
    o_ref[...] = jnp.maximum(y * scale + shift, 0.0).astype(o_ref.dtype)


# ---------------------------------------------------------------------------
# Wrapper
# ---------------------------------------------------------------------------
def _im2col(x_nhwc, kernel_size, stride, padding, kd_pad):
    """Extract conv patches -> (N*OH*OW, kd_pad), (kh, kw, c)-ordered, zero-padded columns."""
    # TODO(synk): move patch extraction into the kernel (halo/strided DMA over the NHWC input)
    # to eliminate the K^2/stride^2 HBM read amplification of wrapper-side im2col.
    n, h, w, c = x_nhwc.shape
    xp = jnp.pad(x_nhwc, ((0, 0), (padding, padding), (padding, padding), (0, 0)))
    oh = (h + 2 * padding - kernel_size) // stride + 1
    ow = (w + 2 * padding - kernel_size) // stride + 1
    cols = []
    for kh in range(kernel_size):
        for kw in range(kernel_size):
            cols.append(xp[:, kh:kh + (oh - 1) * stride + 1:stride,
                              kw:kw + (ow - 1) * stride + 1:stride, :])
    kd = kernel_size * kernel_size * c
    if kd_pad > kd:  # fuse the kd -> kd_pad zero pad into the same concatenate
        cols.append(jnp.zeros((n, oh, ow, kd_pad - kd), x_nhwc.dtype))
    patches = jnp.concatenate(cols, axis=-1)
    return patches.reshape(n * oh * ow, kd_pad), oh, ow


def _choose_tm(m, kd_pad, cout_pad, in_bytes, *, tm_max):
    """Largest M-tile (multiple of 128) whose double-buffered, layout-padded working set fits."""
    tm = min(max(tm_max, TM_GRAIN), _round_up(m, TM_GRAIN))

    def est(t):
        return (2 * t * kd_pad * in_bytes              # double-buffered patch tiles
                + 2 * kd_pad * cout_pad * in_bytes     # weight block
                + 2 * t * cout_pad * in_bytes          # y tiles (materialize path), lane-padded
                + 2 * t * cout_pad * 4                 # f32 output tiles (pass 2), lane-padded
                + 8 * 8 * cout_pad * 4)                # stats / affine rows (sublane-padded)

    while tm > TM_GRAIN and est(tm) > VMEM_TILE_BUDGET:
        tm = max(TM_GRAIN, _round_up(tm // 2, TM_GRAIN))
    return tm


def conv_block_forward(x_nchw, conv_w, conv_b, bn_gamma, bn_beta, *,
                       stride, compute_dtype=jnp.bfloat16, tm_max=2048):
    """ConvBlock.forward. x: (N, Cin, H, W), conv_w: (Cout, Cin, K, K). Returns f32 NCHW."""
    # Conv bias is exactly cancelled by training-mode BN mean subtraction:
    # (y+b) - mean(y+b) == y - mean(y).  NOTE: only valid for batch-stat (training) BN.
    del conv_b
    cout, cin, k, _ = conv_w.shape
    padding = k // 2
    n = x_nchw.shape[0]

    kd = k * k * cin
    kd_pad = _round_up(kd, LANES)        # lane-dense LHS / honest VMEM accounting
    cout_pad = _round_up(cout, LANES)    # lane-dense MXU RHS / stats rows
    in_bytes = jnp.dtype(compute_dtype).itemsize

    # TODO(synk): accept/return NHWC at the model boundary to drop these two transposes.
    x_nhwc = jnp.transpose(x_nchw, (0, 2, 3, 1)).astype(compute_dtype)
    patches, oh, ow = _im2col(x_nhwc, k, stride, padding, kd_pad)      # (M, kd_pad)
    m = n * oh * ow

    tm = _choose_tm(m, kd_pad, cout_pad, in_bytes, tm_max=tm_max)
    n_split = 2 if pl.cdiv(m, tm) >= 2 else 1    # v7x: split pass-1 stats across both TCs
    m_pad = _round_up(m, n_split * tm)
    nt = m_pad // tm
    nt_inner = nt // n_split
    if m_pad != m:
        # Zero rows contribute 0 to both sum and sum-of-squares -> stats stay exact.
        patches = jnp.pad(patches, ((0, m_pad - m), (0, 0)))

    # (Cout, Cin, kh, kw) -> (kh, kw, Cin, Cout) -> (kd, Cout), zero-padded to (kd_pad, cout_pad).
    w_mat = jnp.transpose(conv_w, (2, 3, 1, 0)).reshape(kd, cout)
    w_mat = jnp.pad(w_mat, ((0, kd_pad - kd), (0, cout_pad - cout))).astype(compute_dtype)

    # --- Pass 1: per-channel sum / sum-of-squares (+ optionally materialize y) --------------
    grid1 = (n_split, nt_inner)
    patch_spec = pl.BlockSpec((tm, kd_pad), lambda c, i, nti=nt_inner: (c * nti + i, 0))
    w_spec = pl.BlockSpec((kd_pad, cout_pad), lambda c, i: (0, 0))
    stats_spec = pl.BlockSpec((1, 1, cout_pad), lambda c, i: (c, 0, 0))
    stats_shape = jax.ShapeDtypeStruct((n_split, 1, cout_pad), jnp.float32)
    params1 = pltpu.CompilerParams(dimension_semantics=("parallel", "arbitrary"),
                                   vmem_limit_bytes=VMEM_LIMIT_BYTES)

    # Traffic-adaptive: for large reduction dims, write y once instead of re-reading patches
    # (and re-running the matmul) in pass 2.
    materialize_y = kd_pad > 2 * cout_pad

    if materialize_y:
        y_flat, ysum, ysq = pl.pallas_call(
            functools.partial(_matmul_stats_kernel, cout=cout),
            out_shape=(jax.ShapeDtypeStruct((m_pad, cout), compute_dtype),
                       stats_shape, stats_shape),
            grid=grid1,
            in_specs=[patch_spec, w_spec],
            out_specs=(pl.BlockSpec((tm, cout), lambda c, i, nti=nt_inner: (c * nti + i, 0)),
                       stats_spec, stats_spec),
            compiler_params=params1,
        )(patches, w_mat)
    else:
        y_flat = None
        ysum, ysq = pl.pallas_call(
            _stats_kernel,
            out_shape=(stats_shape, stats_shape),
            grid=grid1,
            in_specs=[patch_spec, w_spec],
            out_specs=(stats_spec, stats_spec),
            compiler_params=params1,
        )(patches, w_mat)

    # --- Tiny glue: finalize batch stats, fold gamma/beta into one (2, cout) affine array ---
    inv_m = jnp.float32(1.0 / m)                        # true element count (pad rows are zero)
    mean = ysum.sum(axis=(0, 1))[:cout] * inv_m         # (cout,)
    # E[y^2] - E[y]^2 in f32 with a non-negativity clamp.
    # TODO(synk): switch to a shifted/centered accumulation if activations ever have |mean|>>std.
    var = jnp.maximum(ysq.sum(axis=(0, 1))[:cout] * inv_m - mean * mean, 0.0)
    inv_std = lax.rsqrt(var + BN_EPS)
    scale = bn_gamma.astype(jnp.float32) * inv_std
    shift = bn_beta.astype(jnp.float32) - mean * scale
    aff = jnp.stack([scale, shift], axis=0)             # (2, cout): row 0 = scale, row 1 = shift

    # --- Pass 2: apply folded BN affine + ReLU, exact-width (cout-lane) f32 output ----------
    params2 = pltpu.CompilerParams(dimension_semantics=("parallel",),
                                   vmem_limit_bytes=VMEM_LIMIT_BYTES)
    out_shape2 = jax.ShapeDtypeStruct((m_pad, cout), jnp.float32)
    out_spec2 = pl.BlockSpec((tm, cout), lambda i: (i, 0))
    aff_spec = pl.BlockSpec((2, cout), lambda i: (0, 0))

    if materialize_y:
        out_flat = pl.pallas_call(
            _affine_relu_kernel,
            out_shape=out_shape2,
            grid=(nt,),
            in_specs=[pl.BlockSpec((tm, cout), lambda i: (i, 0)), aff_spec],
            out_specs=out_spec2,
            compiler_params=params2,
        )(y_flat, aff)
    else:
        out_flat = pl.pallas_call(
            functools.partial(_recompute_apply_kernel, cout=cout),
            out_shape=out_shape2,
            grid=(nt,),
            in_specs=[pl.BlockSpec((tm, kd_pad), lambda i: (i, 0)),
                      pl.BlockSpec((kd_pad, cout_pad), lambda i: (0, 0)),
                      aff_spec],
            out_specs=out_spec2,
            compiler_params=params2,
        )(patches, w_mat, aff)

    out_nhwc = out_flat[:m].reshape(n, oh, ow, cout)
    return jnp.transpose(out_nhwc, (0, 3, 1, 2))        # back to NCHW (module contract)


# ---------------------------------------------------------------------------
# Pure-JAX reference and self-test
# ---------------------------------------------------------------------------
def _reference(x_nchw, conv_w, conv_b, bn_gamma, bn_beta, *, stride):
    k = conv_w.shape[-1]
    p = k // 2
    y = lax.conv_general_dilated(
        x_nchw.astype(jnp.float32), conv_w.astype(jnp.float32),
        window_strides=(stride, stride), padding=((p, p), (p, p)),
        dimension_numbers=("NCHW", "OIHW", "NCHW"))
    y = y + conv_b.reshape(1, -1, 1, 1)
    mean = jnp.mean(y, axis=(0, 2, 3), keepdims=True)
    var = jnp.mean((y - mean) ** 2, axis=(0, 2, 3), keepdims=True)
    y = (y - mean) * lax.rsqrt(var + BN_EPS)
    y = y * bn_gamma.reshape(1, -1, 1, 1) + bn_beta.reshape(1, -1, 1, 1)
    return jnp.maximum(y, 0.0)


if __name__ == "__main__":
    def run_case(n, cin, cout, h, w, k, stride, compute_dtype, atol, rtol, tm_max=2048):
        key = jax.random.PRNGKey(0)
        kx, kw_, kb = jax.random.split(key, 3)
        x = jax.random.normal(kx, (n, cin, h, w), dtype=jnp.float32)
        fan_in = cin * k * k
        bound = 1.0 / np.sqrt(fan_in)
        conv_w = jax.random.uniform(kw_, (cout, cin, k, k), jnp.float32, -bound, bound)
        conv_b = jax.random.uniform(kb, (cout,), jnp.float32, -bound, bound)
        bn_gamma = jnp.ones((cout,), jnp.float32)   # PyTorch BN init: weight=1
        bn_beta = jnp.zeros((cout,), jnp.float32)   # PyTorch BN init: bias=0

        ref = _reference(x, conv_w, conv_b, bn_gamma, bn_beta, stride=stride)
        fwd = jax.jit(functools.partial(conv_block_forward, stride=stride,
                                        compute_dtype=compute_dtype, tm_max=tm_max))
        out = fwd(x, conv_w, conv_b, bn_gamma, bn_beta)
        jax.block_until_ready(out)
        np.testing.assert_allclose(np.asarray(out), np.asarray(ref), atol=atol, rtol=rtol)

    # 1) Module-consistent toy shapes (recompute path), f32 compute: tight parity check.
    run_case(2, 4, 8, 16, 16, 3, 2, jnp.float32, 1e-4, 1e-4)
    # 2) Recompute path, bf16 compute, multi-tile + core-split stats accumulation.
    run_case(8, 4, 8, 16, 16, 3, 2, jnp.bfloat16, 5e-2, 5e-2, tm_max=128)
    # 3) Wider-input layer (kd_pad > 2*cout_pad -> materialize-y path), bf16, core-split.
    run_case(4, 32, 16, 16, 16, 3, 1, jnp.bfloat16, 5e-2, 5e-2, tm_max=256)

    print("KERNEL_OK")
</pallas_src>

<mosaic_0001>
module attributes {stable_mosaic.version = 11 : i64} {
  func.func @_stats_kernel(%arg0: i32, %arg1: i32, %arg2: memref<128x128xf32, #tpu.memory_space<vmem>>, %arg3: memref<128x128xf32, #tpu.memory_space<vmem>>, %arg4: memref<1x1x128xf32, #tpu.memory_space<vmem>>, %arg5: memref<1x1x128xf32, #tpu.memory_space<vmem>>) attributes {dimension_semantics = [#tpu.dimension_semantics<parallel>, #tpu.dimension_semantics<arbitrary>], iteration_bounds = array<i64: 1, 1>, scalar_prefetch = 0 : i64, scratch_operands = 0 : i64, tpu.core_type = #tpu.core_type<tc>, window_params = [{transform_indices = @transform_0, window_bounds = array<i64: 128, 128>}, {pipeline_mode = #tpu.pipeline_mode<synchronous>, transform_indices = @transform_1, window_bounds = array<i64: 128, 128>}, {transform_indices = @transform_2, window_bounds = array<i64: 1, 1, 128>}, {transform_indices = @transform_3, window_bounds = array<i64: 1, 1, 128>}]} {
    %c0_i32 = arith.constant 0 : i32
    %0 = arith.cmpi eq, %arg1, %c0_i32 : i32
    %1 = arith.extui %0 : i1 to i32
    %c0_i32_0 = arith.constant 0 : i32
    %2 = arith.cmpi ne, %1, %c0_i32_0 : i32
    scf.if %2 {
      %cst_18 = arith.constant 0.000000e+00 : f32
      %19 = vector.broadcast %cst_18 : f32 to vector<1x1x128xf32>
      %c0_19 = arith.constant 0 : index
      %c0_20 = arith.constant 0 : index
      %c0_21 = arith.constant 0 : index
      %20 = vector.load %arg4[%c0_19, %c0_20, %c0_21] : memref<1x1x128xf32, #tpu.memory_space<vmem>>, vector<1x1x128xf32>
      tpu.vector_store %arg4[%c0_19, %c0_20, %c0_21], %19 {strides = array<i32>} : memref<1x1x128xf32, #tpu.memory_space<vmem>>, vector<1x1x128xf32>,
      %cst_22 = arith.constant 0.000000e+00 : f32
      %21 = vector.broadcast %cst_22 : f32 to vector<1x1x128xf32>
      %c0_23 = arith.constant 0 : index
      %c0_24 = arith.constant 0 : index
      %c0_25 = arith.constant 0 : index
      %22 = vector.load %arg5[%c0_23, %c0_24, %c0_25] : memref<1x1x128xf32, #tpu.memory_space<vmem>>, vector<1x1x128xf32>
      tpu.vector_store %arg5[%c0_23, %c0_24, %c0_25], %21 {strides = array<i32>} : memref<1x1x128xf32, #tpu.memory_space<vmem>>, vector<1x1x128xf32>,
    } else {
    }
    %c0 = arith.constant 0 : index
    %c0_1 = arith.constant 0 : index
    %3 = vector.load %arg2[%c0, %c0_1] : memref<128x128xf32, #tpu.memory_space<vmem>>, vector<128x128xf32>
    %c0_2 = arith.constant 0 : index
    %c0_3 = arith.constant 0 : index
    %4 = vector.load %arg3[%c0_2, %c0_3] : memref<128x128xf32, #tpu.memory_space<vmem>>, vector<128x128xf32>
    %cst = arith.constant dense<0.000000e+00> : vector<128x128xf32>
    %5 = tpu.matmul %3, %4, %cst {dimension_numbers = #tpu.dot_dimension_numbers<[1], [0], [0], [1], [0, 0, 1, 1], [], []>} : vector<128x128xf32>, vector<128x128xf32>, vector<128x128xf32> -> vector<128x128xf32>
    %c0_4 = arith.constant 0 : index
    %c0_5 = arith.constant 0 : index
    %c0_6 = arith.constant 0 : index
    %6 = vector.load %arg4[%c0_4, %c0_5, %c0_6] : memref<1x1x128xf32, #tpu.memory_space<vmem>>, vector<1x1x128xf32>
    %cst_7 = arith.constant dense<0.000000e+00> : vector<128xf32>
    %7 = vector.multi_reduction <add>, %5, %cst_7 [0] : vector<128x128xf32> to vector<128xf32>
    %8 = vector.shape_cast %7 : vector<128xf32> to vector<1x128xf32>
    %9 = vector.shape_cast %8 : vector<1x128xf32> to vector<1x1x128xf32>
    %10 = arith.addf %6, %9 : vector<1x1x128xf32>
    %c0_8 = arith.constant 0 : index
    %c0_9 = arith.constant 0 : index
    %c0_10 = arith.constant 0 : index
    %11 = vector.load %arg4[%c0_8, %c0_9, %c0_10] : memref<1x1x128xf32, #tpu.memory_space<vmem>>, vector<1x1x128xf32>
    tpu.vector_store %arg4[%c0_8, %c0_9, %c0_10], %10 {strides = array<i32>} : memref<1x1x128xf32, #tpu.memory_space<vmem>>, vector<1x1x128xf32>,
    %c0_11 = arith.constant 0 : index
    %c0_12 = arith.constant 0 : index
    %c0_13 = arith.constant 0 : index
    %12 = vector.load %arg5[%c0_11, %c0_12, %c0_13] : memref<1x1x128xf32, #tpu.memory_space<vmem>>, vector<1x1x128xf32>
    %13 = arith.mulf %5, %5 : vector<128x128xf32>
    %cst_14 = arith.constant dense<0.000000e+00> : vector<128xf32>
    %14 = vector.multi_reduction <add>, %13, %cst_14 [0] : vector<128x128xf32> to vector<128xf32>
    %15 = vector.shape_cast %14 : vector<128xf32> to vector<1x128xf32>
    %16 = vector.shape_cast %15 : vector<1x128xf32> to vector<1x1x128xf32>
    %17 = arith.addf %12, %16 : vector<1x1x128xf32>
    %c0_15 = arith.constant 0 : index
    %c0_16 = arith.constant 0 : index
    %c0_17 = arith.constant 0 : index
    %18 = vector.load %arg5[%c0_15, %c0_16, %c0_17] : memref<1x1x128xf32, #tpu.memory_space<vmem>>, vector<1x1x128xf32>
    tpu.vector_store %arg5[%c0_15, %c0_16, %c0_17], %17 {strides = array<i32>} : memref<1x1x128xf32, #tpu.memory_space<vmem>>, vector<1x1x128xf32>,
    return
  }
  func.func @transform_0(%arg0: i32, %arg1: i32) -> (i32, i32) {
    %c1_i32 = arith.constant 1 : i32
    %0 = arith.muli %arg0, %c1_i32 : i32
    %1 = arith.addi %0, %arg1 : i32
    %c0_i32 = arith.constant 0 : i32
    %c0_i32_0 = arith.constant 0 : i32
    return %1, %c0_i32 : i32, i32
  }
  func.func @transform_1(%arg0: i32, %arg1: i32) -> (i32, i32) {
    %c0_i32 = arith.constant 0 : i32
    %c0_i32_0 = arith.constant 0 : i32
    %c0_i32_1 = arith.constant 0 : i32
    return %c0_i32, %c0_i32_0 : i32, i32
  }
  func.func @transform_2(%arg0: i32, %arg1: i32) -> (i32, i32, i32) {
    %c0_i32 = arith.constant 0 : i32
    %c0_i32_0 = arith.constant 0 : i32
    %c0_i32_1 = arith.constant 0 : i32
    return %arg0, %c0_i32, %c0_i32_0 : i32, i32, i32
  }
  func.func @transform_3(%arg0: i32, %arg1: i32) -> (i32, i32, i32) {
    %c0_i32 = arith.constant 0 : i32
    %c0_i32_0 = arith.constant 0 : i32
    %c0_i32_1 = arith.constant 0 : i32
    return %arg0, %c0_i32, %c0_i32_0 : i32, i32, i32
  }
}

module attributes {stable_mosaic.version = 11 : i64} {
  func.func @_recompute_apply_kernel(%arg0: i32, %arg1: memref<128x128xf32, #tpu.memory_space<vmem>>, %arg2: memref<128x128xf32, #tpu.memory_space<vmem>>, %arg3: memref<2x8xf32, #tpu.memory_space<vmem>>, %arg4: memref<128x8xf32, #tpu.memory_space<vmem>>) attributes {dimension_semantics = [#tpu.dimension_semantics<parallel>], iteration_bounds = array<i64: 1>, scalar_prefetch = 0 : i64, scratch_operands = 0 : i64, tpu.core_type = #tpu.core_type<tc>, window_params = [{transform_indices = @transform_0, window_bounds = array<i64: 128, 128>}, {pipeline_mode = #tpu.pipeline_mode<synchronous>, transform_indices = @transform_1, window_bounds = array<i64: 128, 128>}, {pipeline_mode = #tpu.pipeline_mode<synchronous>, transform_indices = @transform_2, window_bounds = array<i64: 2, 8>}, {transform_indices = @transform_3, window_bounds = array<i64: 128, 8>}]} {
    %c0 = arith.constant 0 : index
    %c0_0 = arith.constant 0 : index
    %0 = vector.load %arg1[%c0, %c0_0] : memref<128x128xf32, #tpu.memory_space<vmem>>, vector<128x128xf32>
    %c0_1 = arith.constant 0 : index
    %c0_2 = arith.constant 0 : index
    %1 = vector.load %arg2[%c0_1, %c0_2] : memref<128x128xf32, #tpu.memory_space<vmem>>, vector<128x128xf32>
    %cst = arith.constant dense<0.000000e+00> : vector<128x128xf32>
    %2 = tpu.matmul %0, %1, %cst {dimension_numbers = #tpu.dot_dimension_numbers<[1], [0], [0], [1], [0, 0, 1, 1], [], []>} : vector<128x128xf32>, vector<128x128xf32>, vector<128x128xf32> -> vector<128x128xf32>
    %c0_3 = arith.constant 0 : index
    %c0_4 = arith.constant 0 : index
    %3 = vector.load %arg3[%c0_3, %c0_4] : memref<2x8xf32, #tpu.memory_space<vmem>>, vector<1x8xf32>
    %c1 = arith.constant 1 : index
    %c0_5 = arith.constant 0 : index
    %4 = vector.load %arg3[%c1, %c0_5] : memref<2x8xf32, #tpu.memory_space<vmem>>, vector<1x8xf32>
    %5 = vector.extract_strided_slice %2 {offsets = [0, 0], sizes = [128, 8], strides = [1, 1]} : vector<128x128xf32> to vector<128x8xf32>
    %6 = vector.broadcast %3 : vector<1x8xf32> to vector<128x8xf32>
    %7 = arith.mulf %5, %6 : vector<128x8xf32>
    %8 = vector.broadcast %4 : vector<1x8xf32> to vector<128x8xf32>
    %9 = arith.addf %7, %8 : vector<128x8xf32>
    %cst_6 = arith.constant 0.000000e+00 : f32
    %10 = vector.broadcast %cst_6 : f32 to vector<128x8xf32>
    %11 = arith.maximumf %9, %10 : vector<128x8xf32>
    %c0_7 = arith.constant 0 : index
    %c0_8 = arith.constant 0 : index
    %12 = vector.load %arg4[%c0_7, %c0_8] : memref<128x8xf32, #tpu.memory_space<vmem>>, vector<128x8xf32>
    tpu.vector_store %arg4[%c0_7, %c0_8], %11 {strides = array<i32>} : memref<128x8xf32, #tpu.memory_space<vmem>>, vector<128x8xf32>,
    return
  }
  func.func @transform_0(%arg0: i32) -> (i32, i32) {
    %c0_i32 = arith.constant 0 : i32
    %c0_i32_0 = arith.constant 0 : i32
    return %arg0, %c0_i32 : i32, i32
  }
  func.func @transform_1(%arg0: i32) -> (i32, i32) {
    %c0_i32 = arith.constant 0 : i32
    %c0_i32_0 = arith.constant 0 : i32
    %c0_i32_1 = arith.constant 0 : i32
    return %c0_i32, %c0_i32_0 : i32, i32
  }
  func.func @transform_2(%arg0: i32) -> (i32, i32) {
    %c0_i32 = arith.constant 0 : i32
    %c0_i32_0 = arith.constant 0 : i32
    %c0_i32_1 = arith.constant 0 : i32
    return %c0_i32, %c0_i32_0 : i32, i32
  }
  func.func @transform_3(%arg0: i32) -> (i32, i32) {
    %c0_i32 = arith.constant 0 : i32
    %c0_i32_0 = arith.constant 0 : i32
    return %arg0, %c0_i32 : i32, i32
  }
}

</mosaic_0001>

<llo_original>
// kernel: conv_block_forward.3
$region0: #{conv_block_forward.3}
  #allocation0 [shape = 'u32[]', space=smem, size = 0x4, offset = 0x4, fixed_abs, tag = 'smem constant byte address 0x4 - core index']
  #allocation1 [shape = 'u32[72,128]{1,0:T(1,128)}', space=vmem, size = 0x9000, scoped, tag = 'internal scratch']
  %s0 = inlined_call_operand.vmem [shape: f32[128,128], index: 0, kind: input, shape index: {}]
  %s1 = inlined_call_operand.vmem [shape: f32[128,128], index: 1, kind: input, shape index: {}]
  %s2 = inlined_call_operand.vmem [shape: f32[2,8], index: 2, kind: input, shape index: {}]
  %s3 = inlined_call_operand.vmem [shape: f32[128,8], index: 3, kind: output, shape index: {}]
  %s4 = sld [smem:[#allocation0]]
  $region22: #{conv_block_forward.3} parent=0
    _
  %s6 = ssub.s32 1, %s4
  %s7 = scalar_select 0, %s6, %s4
  // Predicated region
  $region2: #{conv_block_forward.3} parent=0 // pred_check
    _
  $region3: #{conv_block_forward.3} parent=0 // pred_check_branch
    %9 = sbr.rel (0) target = $region5
  $region4: #{conv_block_forward.3} parent=0 // pred_region
    _
  $region5: #{conv_block_forward.3} parent=0 // pred_fallthru
    _
  // Predicated region
  $region6: #{conv_block_forward.3} parent=0 // pred_check
    _
  $region7: #{conv_block_forward.3} parent=0 // pred_check_branch
    %11 = sbr.rel (0) target = $region9
  $region8: #{conv_block_forward.3} parent=0 // pred_region
    _
  $region9: #{conv_block_forward.3} parent=0 // pred_fallthru
    _
  // Predicated region
  $region10: #{conv_block_forward.3} parent=0 // pred_check
    _
  $region11: #{conv_block_forward.3} parent=0 // pred_check_branch
    %13 = sbr.rel (0) target = $region13
  $region12: #{conv_block_forward.3} parent=0 // pred_region
    _
  $region13: #{conv_block_forward.3} parent=0 // pred_fallthru
    _
  %v14 = vld [vmem:[%s0] sm:$0xff]
  %v15 = vld [vmem:[%s0 + $0x8] sm:$0xff]
  %v16 = vld [vmem:[%s0 + $0x10] sm:$0xff]
  %v17 = vld [vmem:[%s0 + $0x18] sm:$0xff]
  %v18 = vld [vmem:[%s0 + $0x20] sm:$0xff]
  %v19 = vld [vmem:[%s0 + $0x28] sm:$0xff]
  %v20 = vld [vmem:[%s0 + $0x30] sm:$0xff]
  %v21 = vld [vmem:[%s0 + $0x38] sm:$0xff]
  %v22 = vld [vmem:[%s0 + $0x40] sm:$0xff]
  %v23 = vld [vmem:[%s0 + $0x48] sm:$0xff]
  %v24 = vld [vmem:[%s0 + $0x50] sm:$0xff]
  %v25 = vld [vmem:[%s0 + $0x58] sm:$0xff]
  %v26 = vld [vmem:[%s0 + $0x60] sm:$0xff]
  %v27 = vld [vmem:[%s0 + $0x68] sm:$0xff]
  %v28 = vld [vmem:[%s0 + $0x70] sm:$0xff]
  %v29 = vld [vmem:[%s0 + $0x78] sm:$0xff]
  %v30 = vld [vmem:[%s1] sm:$0xff]
  %v31 = vld [vmem:[%s1 + $0x8] sm:$0xff]
  %v32 = vld [vmem:[%s1 + $0x10] sm:$0xff]
  %v33 = vld [vmem:[%s1 + $0x18] sm:$0xff]
  %v34 = vld [vmem:[%s1 + $0x20] sm:$0xff]
  %v35 = vld [vmem:[%s1 + $0x28] sm:$0xff]
  %v36 = vld [vmem:[%s1 + $0x30] sm:$0xff]
  %v37 = vld [vmem:[%s1 + $0x38] sm:$0xff]
  %v38 = vld [vmem:[%s1 + $0x40] sm:$0xff]
  %v39 = vld [vmem:[%s1 + $0x48] sm:$0xff]
  %v40 = vld [vmem:[%s1 + $0x50] sm:$0xff]
  %v41 = vld [vmem:[%s1 + $0x58] sm:$0xff]
  %v42 = vld [vmem:[%s1 + $0x60] sm:$0xff]
  %v43 = vld [vmem:[%s1 + $0x68] sm:$0xff]
  %v44 = vld [vmem:[%s1 + $0x70] sm:$0xff]
  %v45 = vld [vmem:[%s1 + $0x78] sm:$0xff]
  %46 = vmatpush.msra.mxu0 %v45
  %47 = vmatpush.msra.mxu0 %v44
  %48 = vmatpush.msra.mxu0 %v43
  %49 = vmatpush.msra.mxu0 %v42
  %50 = vmatpush.msra.mxu0 %v41
  %51 = vmatpush.msra.mxu0 %v40
  %52 = vmatpush.msra.mxu0 %v39
  %53 = vmatpush.msra.mxu0 %v38
  %54 = vmatpush.msra.mxu0 %v37
  %55 = vmatpush.msra.mxu0 %v36
  %56 = vmatpush.msra.mxu0 %v35
  %57 = vmatpush.msra.mxu0 %v34
  %58 = vmatpush.msra.mxu0 %v33
  %59 = vmatpush.msra.mxu0 %v32
  %60 = vmatpush.msra.mxu0 %v31
  %61 = vmatpush.msra.mxu0 %v30
  %62 = vmatmul.f32.gmra.mxu0 %v14
  %v63 = vpop.f32.mrf.mxu0
  %v64 = vadd.f32 0.0, %v63
  %65 = vmatmul.f32.gmra.mxu0 %v15
  %v66 = vpop.f32.mrf.mxu0
  %v67 = vadd.f32 0.0, %v66
  %68 = vmatmul.f32.gmra.mxu0 %v16
  %v69 = vpop.f32.mrf.mxu0
  %v70 = vadd.f32 0.0, %v69
  %71 = vmatmul.f32.gmra.mxu0 %v17
  %v72 = vpop.f32.mrf.mxu0
  %v73 = vadd.f32 0.0, %v72
  %74 = vmatmul.f32.gmra.mxu0 %v18
  %v75 = vpop.f32.mrf.mxu0
  %v76 = vadd.f32 0.0, %v75
  %77 = vmatmul.f32.gmra.mxu0 %v19
  %v78 = vpop.f32.mrf.mxu0
  %v79 = vadd.f32 0.0, %v78
  %80 = vmatmul.f32.gmra.mxu0 %v20
  %v81 = vpop.f32.mrf.mxu0
  %v82 = vadd.f32 0.0, %v81
  %83 = vmatmul.f32.gmra.mxu0 %v21
  %v84 = vpop.f32.mrf.mxu0
  %v85 = vadd.f32 0.0, %v84
  %86 = vmatmul.f32.gmra.mxu0 %v22
  %v87 = vpop.f32.mrf.mxu0
  %v88 = vadd.f32 0.0, %v87
  %89 = vmatmul.f32.gmra.mxu0 %v23
  %v90 = vpop.f32.mrf.mxu0
  %v91 = vadd.f32 0.0, %v90
  %92 = vmatmul.f32.gmra.mxu0 %v24
  %v93 = vpop.f32.mrf.mxu0
  %v94 = vadd.f32 0.0, %v93
  %95 = vmatmul.f32.gmra.mxu0 %v25
  %v96 = vpop.f32.mrf.mxu0
  %v97 = vadd.f32 0.0, %v96
  %98 = vmatmul.f32.gmra.mxu0 %v26
  %v99 = vpop.f32.mrf.mxu0
  %v100 = vadd.f32 0.0, %v99
  %101 = vmatmul.f32.gmra.mxu0 %v27
  %v102 = vpop.f32.mrf.mxu0
  %v103 = vadd.f32 0.0, %v102
  %104 = vmatmul.f32.gmra.mxu0 %v28
  %v105 = vpop.f32.mrf.mxu0
  %v106 = vadd.f32 0.0, %v105
  %107 = vmatmul.f32.gmra.mxu0 %v29
  %v108 = vpop.f32.mrf.mxu0
  %v109 = vadd.f32 0.0, %v108
  %110 = vdwg.mxu0
  %v111 = vld [vmem:[%s2] sm:$0x1]
  %v112 = vld [vmem:[%s2 + $0x1] sm:$0x1]
  %v113 = vperm.slane %v111, 0
  %v114 = vmul.f32 %v64, %v113
  %v115 = vmul.f32 %v67, %v113
  %v116 = vmul.f32 %v70, %v113
  %v117 = vmul.f32 %v73, %v113
  %v118 = vmul.f32 %v76, %v113
  %v119 = vmul.f32 %v79, %v113
  %v120 = vmul.f32 %v82, %v113
  %v121 = vmul.f32 %v85, %v113
  %v122 = vmul.f32 %v88, %v113
  %v123 = vmul.f32 %v91, %v113
  %v124 = vmul.f32 %v94, %v113
  %v125 = vmul.f32 %v97, %v113
  %v126 = vmul.f32 %v100, %v113
  %v127 = vmul.f32 %v103, %v113
  %v128 = vmul.f32 %v106, %v113
  %v129 = vmul.f32 %v109, %v113
  %v130 = vperm.slane %v112, 0
  %v131 = vadd.f32 %v114, %v130
  %v132 = vadd.f32 %v115, %v130
  %v133 = vadd.f32 %v116, %v130
  %v134 = vadd.f32 %v117, %v130
  %v135 = vadd.f32 %v118, %v130
  %v136 = vadd.f32 %v119, %v130
  %v137 = vadd.f32 %v120, %v130
  %v138 = vadd.f32 %v121, %v130
  %v139 = vadd.f32 %v122, %v130
  %v140 = vadd.f32 %v123, %v130
  %v141 = vadd.f32 %v124, %v130
  %v142 = vadd.f32 %v125, %v130
  %v143 = vadd.f32 %v126, %v130
  %v144 = vadd.f32 %v127, %v130
  %v145 = vadd.f32 %v128, %v130
  %v146 = vadd.f32 %v129, %v130
  %v147 = vmax.f32 %v131, 0.0
  %v148 = vmax.f32 %v132, 0.0
  %v149 = vmax.f32 %v133, 0.0
  %v150 = vmax.f32 %v134, 0.0
  %v151 = vmax.f32 %v135, 0.0
  %v152 = vmax.f32 %v136, 0.0
  %v153 = vmax.f32 %v137, 0.0
  %v154 = vmax.f32 %v138, 0.0
  %v155 = vmax.f32 %v139, 0.0
  %v156 = vmax.f32 %v140, 0.0
  %v157 = vmax.f32 %v141, 0.0
  %v158 = vmax.f32 %v142, 0.0
  %v159 = vmax.f32 %v143, 0.0
  %v160 = vmax.f32 %v144, 0.0
  %v161 = vmax.f32 %v145, 0.0
  %v162 = vmax.f32 %v146, 0.0
  %vm163 = vcmask 64512
  %164 = vst.msk [vmem:[%s3] sm:$0xff] %vm163, %v147
  %165 = vst.msk [vmem:[%s3 + $0x8] sm:$0xff] %vm163, %v148
  %166 = vst.msk [vmem:[%s3 + $0x10] sm:$0xff] %vm163, %v149
  %167 = vst.msk [vmem:[%s3 + $0x18] sm:$0xff] %vm163, %v150
  %168 = vst.msk [vmem:[%s3 + $0x20] sm:$0xff] %vm163, %v151
  %169 = vst.msk [vmem:[%s3 + $0x28] sm:$0xff] %vm163, %v152
  %170 = vst.msk [vmem:[%s3 + $0x30] sm:$0xff] %vm163, %v153
  %171 = vst.msk [vmem:[%s3 + $0x38] sm:$0xff] %vm163, %v154
  %172 = vst.msk [vmem:[%s3 + $0x40] sm:$0xff] %vm163, %v155
  %173 = vst.msk [vmem:[%s3 + $0x48] sm:$0xff] %vm163, %v156
  %174 = vst.msk [vmem:[%s3 + $0x50] sm:$0xff] %vm163, %v157
  %175 = vst.msk [vmem:[%s3 + $0x58] sm:$0xff] %vm163, %v158
  %176 = vst.msk [vmem:[%s3 + $0x60] sm:$0xff] %vm163, %v159
  %177 = vst.msk [vmem:[%s3 + $0x68] sm:$0xff] %vm163, %v160
  %178 = vst.msk [vmem:[%s3 + $0x70] sm:$0xff] %vm163, %v161
  %179 = vst.msk [vmem:[%s3 + $0x78] sm:$0xff] %vm163, %v162
  // Predicated region
  $region14: #{conv_block_forward.3} parent=0 // pred_check
    _
  $region15: #{conv_block_forward.3} parent=0 // pred_check_branch
    %181 = sbr.rel (0) target = $region17
  $region16: #{conv_block_forward.3} parent=0 // pred_region
    _
  $region17: #{conv_block_forward.3} parent=0 // pred_fallthru
    _
  // Predicated region
  $region18: #{conv_block_forward.3} parent=0 // pred_check
    _
  $region19: #{conv_block_forward.3} parent=0 // pred_check_branch
    %183 = sbr.rel (0) target = $region21
  $region20: #{conv_block_forward.3} parent=0 // pred_region
    _
  $region21: #{conv_block_forward.3} parent=0 // pred_fallthru
    _

// kernel: conv_block_forward.2
$region0: #{conv_block_forward.2}
  #allocation0 [shape = 'u32[]', space=smem, size = 0x4, offset = 0x4, fixed_abs, tag = 'smem constant byte address 0x4 - core index']
  #allocation1 [shape = 'u32[72,128]{1,0:T(1,128)}', space=vmem, size = 0x9000, scoped, tag = 'internal scratch']
  %s0 = inlined_call_operand.vmem [shape: f32[128,128], index: 0, kind: input, shape index: {}]
  %s1 = inlined_call_operand.vmem [shape: f32[128,128], index: 1, kind: input, shape index: {}]
  %s2 = inlined_call_operand.vmem [shape: f32[1,1,128], index: 2, kind: output, shape index: {0}]
  %s3 = inlined_call_operand.vmem [shape: f32[1,1,128], index: 3, kind: output, shape index: {1}]
  %4 = xla_tuple %s2, %s3
  %s5 = sld [smem:[#allocation0]]
  $region30: #{conv_block_forward.2} parent=0
    _
  %s7 = ssub.s32 1, %s5
  %s8 = scalar_select 0, %s7, %s5
  // Predicated region
  $region2: #{conv_block_forward.2} parent=0 // pred_check
    _
  $region3: #{conv_block_forward.2} parent=0 // pred_check_branch
    %10 = sbr.rel (0) target = $region5
  $region4: #{conv_block_forward.2} parent=0 // pred_region
    %s11 = sadd.s32 0, 0
    %s12 = smul.u32 16, %s11
    %p13 = scmp.lt.s32.totalorder %s12, 15
    %s14 = scalar_select %p13, %s12, 15
    %s15 = smul.addr %s14, 8
    %s16 = scalar_lea.vmem %s0, %s15
    %s17 = sadd.s32 0, 0
    %s18 = smul.u32 16, %s17
  $region5: #{conv_block_forward.2} parent=0 // pred_fallthru
    _
  // Predicated region
  $region6: #{conv_block_forward.2} parent=0 // pred_check
    _
  $region7: #{conv_block_forward.2} parent=0 // pred_check_branch
    %20 = sbr.rel (0) target = $region9
  $region8: #{conv_block_forward.2} parent=0 // pred_region
    _
  $region9: #{conv_block_forward.2} parent=0 // pred_fallthru
    _
  %s21 = sadd.s32 0, 0
  %s22 = smul.u32 16, %s21
  %p23 = scmp.lt.s32.totalorder %s22, 15
  %s24 = scalar_select %p23, %s22, 15
  %s25 = smul.addr %s24, 8
  %s26 = scalar_lea.vmem %s0, %s25
  %s27 = sadd.s32 0, 0
  %s28 = smul.u32 16, %s27
  %p29 = scmp.lt.s32.totalorder %s28, 15
  %s30 = scalar_select %p29, %s28, 15
  %s31 = smul.addr %s30, 8
  %s32 = scalar_lea.vmem %s0, %s31
  %s33 = sadd.s32 0, 0
  %s34 = smul.u32 16, %s33
  %p35 = scmp.eq.s32.totalorder 0, 0
  // Predicated region
  $region10: #{conv_block_forward.2} parent=0 // pred_check
    %p36 = pneg %p35
  $region11: #{conv_block_forward.2} parent=0 // pred_check_branch
    %38 = sbr.rel (%p36) target = $region13
  $region12: #{conv_block_forward.2} parent=0 // pred_region
    %39 = vst [vmem:[%s2] sm:$0x1] 0.0
    %40 = vst [vmem:[%s3] sm:$0x1] 0.0
  $region13: #{conv_block_forward.2} parent=0 // pred_fallthru
    _
  %v41 = vld [vmem:[%s32] sm:$0xff]
  %v42 = vld [vmem:[%s32 + $0x8] sm:$0xff]
  %v43 = vld [vmem:[%s32 + $0x10] sm:$0xff]
  %v44 = vld [vmem:[%s32 + $0x18] sm:$0xff]
  %v45 = vld [vmem:[%s32 + $0x20] sm:$0xff]
  %v46 = vld [vmem:[%s32 + $0x28] sm:$0xff]
  %v47 = vld [vmem:[%s32 + $0x30] sm:$0xff]
  %v48 = vld [vmem:[%s32 + $0x38] sm:$0xff]
  %v49 = vld [vmem:[%s32 + $0x40] sm:$0xff]
  %v50 = vld [vmem:[%s32 + $0x48] sm:$0xff]
  %v51 = vld [vmem:[%s32 + $0x50] sm:$0xff]
  %v52 = vld [vmem:[%s32 + $0x58] sm:$0xff]
  %v53 = vld [vmem:[%s32 + $0x60] sm:$0xff]
  %v54 = vld [vmem:[%s32 + $0x68] sm:$0xff]
  %v55 = vld [vmem:[%s32 + $0x70] sm:$0xff]
  %v56 = vld [vmem:[%s32 + $0x78] sm:$0xff]
  %v57 = vld [vmem:[%s1] sm:$0xff]
  %v58 = vld [vmem:[%s1 + $0x8] sm:$0xff]
  %v59 = vld [vmem:[%s1 + $0x10] sm:$0xff]
  %v60 = vld [vmem:[%s1 + $0x18] sm:$0xff]
  %v61 = vld [vmem:[%s1 + $0x20] sm:$0xff]
  %v62 = vld [vmem:[%s1 + $0x28] sm:$0xff]
  %v63 = vld [vmem:[%s1 + $0x30] sm:$0xff]
  %v64 = vld [vmem:[%s1 + $0x38] sm:$0xff]
  %v65 = vld [vmem:[%s1 + $0x40] sm:$0xff]
  %v66 = vld [vmem:[%s1 + $0x48] sm:$0xff]
  %v67 = vld [vmem:[%s1 + $0x50] sm:$0xff]
  %v68 = vld [vmem:[%s1 + $0x58] sm:$0xff]
  %v69 = vld [vmem:[%s1 + $0x60] sm:$0xff]
  %v70 = vld [vmem:[%s1 + $0x68] sm:$0xff]
  %v71 = vld [vmem:[%s1 + $0x70] sm:$0xff]
  %v72 = vld [vmem:[%s1 + $0x78] sm:$0xff]
  %73 = vmatpush.msra.mxu0 %v72
  %74 = vmatpush.msra.mxu0 %v71
  %75 = vmatpush.msra.mxu0 %v70
  %76 = vmatpush.msra.mxu0 %v69
  %77 = vmatpush.msra.mxu0 %v68
  %78 = vmatpush.msra.mxu0 %v67
  %79 = vmatpush.msra.mxu0 %v66
  %80 = vmatpush.msra.mxu0 %v65
  %81 = vmatpush.msra.mxu0 %v64
  %82 = vmatpush.msra.mxu0 %v63
  %83 = vmatpush.msra.mxu0 %v62
  %84 = vmatpush.msra.mxu0 %v61
  %85 = vmatpush.msra.mxu0 %v60
  %86 = vmatpush.msra.mxu0 %v59
  %87 = vmatpush.msra.mxu0 %v58
  %88 = vmatpush.msra.mxu0 %v57
  %89 = vmatmul.f32.gmra.mxu0 %v41
  %v90 = vpop.f32.mrf.mxu0
  %v91 = vadd.f32 0.0, %v90
  %92 = vmatmul.f32.gmra.mxu0 %v42
  %v93 = vpop.f32.mrf.mxu0
  %v94 = vadd.f32 0.0, %v93
  %95 = vmatmul.f32.gmra.mxu0 %v43
  %v96 = vpop.f32.mrf.mxu0
  %v97 = vadd.f32 0.0, %v96
  %98 = vmatmul.f32.gmra.mxu0 %v44
  %v99 = vpop.f32.mrf.mxu0
  %v100 = vadd.f32 0.0, %v99
  %101 = vmatmul.f32.gmra.mxu0 %v45
  %v102 = vpop.f32.mrf.mxu0
  %v103 = vadd.f32 0.0, %v102
  %104 = vmatmul.f32.gmra.mxu0 %v46
  %v105 = vpop.f32.mrf.mxu0
  %v106 = vadd.f32 0.0, %v105
  %107 = vmatmul.f32.gmra.mxu0 %v47
  %v108 = vpop.f32.mrf.mxu0
  %v109 = vadd.f32 0.0, %v108
  %110 = vmatmul.f32.gmra.mxu0 %v48
  %v111 = vpop.f32.mrf.mxu0
  %v112 = vadd.f32 0.0, %v111
  %113 = vmatmul.f32.gmra.mxu0 %v49
  %v114 = vpop.f32.mrf.mxu0
  %v115 = vadd.f32 0.0, %v114
  %116 = vmatmul.f32.gmra.mxu0 %v50
  %v117 = vpop.f32.mrf.mxu0
  %v118 = vadd.f32 0.0, %v117
  %119 = vmatmul.f32.gmra.mxu0 %v51
  %v120 = vpop.f32.mrf.mxu0
  %v121 = vadd.f32 0.0, %v120
  %122 = vmatmul.f32.gmra.mxu0 %v52
  %v123 = vpop.f32.mrf.mxu0
  %v124 = vadd.f32 0.0, %v123
  %125 = vmatmul.f32.gmra.mxu0 %v53
  %v126 = vpop.f32.mrf.mxu0
  %v127 = vadd.f32 0.0, %v126
  %128 = vmatmul.f32.gmra.mxu0 %v54
  %v129 = vpop.f32.mrf.mxu0
  %v130 = vadd.f32 0.0, %v129
  %131 = vmatmul.f32.gmra.mxu0 %v55
  %v132 = vpop.f32.mrf.mxu0
  %v133 = vadd.f32 0.0, %v132
  %134 = vmatmul.f32.gmra.mxu0 %v56
  %v135 = vpop.f32.mrf.mxu0
  %v136 = vadd.f32 0.0, %v135
  %137 = vdwg.mxu0
  %v138 = vld [vmem:[%s2] sm:$0x1]
  %v139 = vadd.f32 %v91, %v94
  %v140 = vadd.f32 %v139, %v97
  %v141 = vadd.f32 %v140, %v100
  %v142 = vadd.f32 %v141, %v103
  %v143 = vadd.f32 %v142, %v106
  %v144 = vadd.f32 %v143, %v109
  %v145 = vadd.f32 %v144, %v112
  %v146 = vadd.f32 %v145, %v115
  %v147 = vadd.f32 %v146, %v118
  %v148 = vadd.f32 %v147, %v121
  %v149 = vadd.f32 %v148, %v124
  %v150 = vadd.f32 %v149, %v127
  %v151 = vadd.f32 %v150, %v130
  %v152 = vadd.f32 %v151, %v133
  %v153 = vadd.f32 %v152, %v136
  %v154 = vrot.slane %v153, 4
  %v155 = vadd.f32 %v153, %v154
  %v156 = vrot.slane %v155, 2
  %v157 = vadd.f32 %v155, %v156
  %v158 = vrot.slane %v157, 1
  %v159 = vadd.f32 %v157, %v158
  %v160 = vadd.f32 %v138, %v159
  %161 = vst [vmem:[%s2] sm:$0x1] %v160
  %v162 = vld [vmem:[%s3] sm:$0x1]
  %v163 = vmul.f32 %v91, %v91
  %v164 = vmul.f32 %v94, %v94
  %v165 = vmul.f32 %v97, %v97
  %v166 = vmul.f32 %v100, %v100
  %v167 = vmul.f32 %v103, %v103
  %v168 = vmul.f32 %v106, %v106
  %v169 = vmul.f32 %v109, %v109
  %v170 = vmul.f32 %v112, %v112
  %v171 = vmul.f32 %v115, %v115
  %v172 = vmul.f32 %v118, %v118
  %v173 = vmul.f32 %v121, %v121
  %v174 = vmul.f32 %v124, %v124
  %v175 = vmul.f32 %v127, %v127
  %v176 = vmul.f32 %v130, %v130
  %v177 = vmul.f32 %v133, %v133
  %v178 = vmul.f32 %v136, %v136
  %v179 = vadd.f32 %v163, %v164
  %v180 = vadd.f32 %v179, %v165
  %v181 = vadd.f32 %v180, %v166
  %v182 = vadd.f32 %v181, %v167
  %v183 = vadd.f32 %v182, %v168
  %v184 = vadd.f32 %v183, %v169
  %v185 = vadd.f32 %v184, %v170
  %v186 = vadd.f32 %v185, %v171
  %v187 = vadd.f32 %v186, %v172
  %v188 = vadd.f32 %v187, %v173
  %v189 = vadd.f32 %v188, %v174
  %v190 = vadd.f32 %v189, %v175
  %v191 = vadd.f32 %v190, %v176
  %v192 = vadd.f32 %v191, %v177
  %v193 = vadd.f32 %v192, %v178
  %v194 = vrot.slane %v193, 4
  %v195 = vadd.f32 %v193, %v194
  %v196 = vrot.slane %v195, 2
  %v197 = vadd.f32 %v195, %v196
  %v198 = vrot.slane %v197, 1
  %v199 = vadd.f32 %v197, %v198
  %v200 = vadd.f32 %v162, %v199
  %201 = vst [vmem:[%s3] sm:$0x1] %v200
  // Predicated region
  $region14: #{conv_block_forward.2} parent=0 // pred_check
    _
  $region15: #{conv_block_forward.2} parent=0 // pred_check_branch
    %203 = sbr.rel (0) target = $region17
  $region16: #{conv_block_forward.2} parent=0 // pred_region
    _
  $region17: #{conv_block_forward.2} parent=0 // pred_fallthru
    _
  // Predicated region
  $region18: #{conv_block_forward.2} parent=0 // pred_check
    _
  $region19: #{conv_block_forward.2} parent=0 // pred_check_branch
    %205 = sbr.rel (0) target = $region21
  $region20: #{conv_block_forward.2} parent=0 // pred_region
    _
  $region21: #{conv_block_forward.2} parent=0 // pred_fallthru
    _
  // Predicated region
  $region22: #{conv_block_forward.2} parent=0 // pred_check
    _
  $region23: #{conv_block_forward.2} parent=0 // pred_check_branch
    %207 = sbr.rel (0) target = $region25
  $region24: #{conv_block_forward.2} parent=0 // pred_region
    _
  $region25: #{conv_block_forward.2} parent=0 // pred_fallthru
    _
  // Predicated region
  $region26: #{conv_block_forward.2} parent=0 // pred_check
    _
  $region27: #{conv_block_forward.2} parent=0 // pred_check_branch
    %209 = sbr.rel (0) target = $region29
  $region28: #{conv_block_forward.2} parent=0 // pred_region
    _
  $region29: #{conv_block_forward.2} parent=0 // pred_fallthru
    _

</llo_original>
